<compile_context>
chip_gen: v7x
topology: tpu7x:2x2x1
jax: 0.10.0
libtpu: 0.0.40
codegen_flags: <defaults>
</compile_context>

<pallas_src>
import functools

import jax
import jax.numpy as jnp
from jax import lax
from jax.experimental import pallas as pl
from jax.experimental.pallas import tpu as pltpu


def _round_up(n: int, m: int) -> int:
    return (n + m - 1) // m * m


def _emotion_head_kernel(
    x_ref,            # [TB, D]            input block
    w1_ref,           # [D, 2D]            fused first Linear (mean | logvar)
    aux_ref,          # [3, 2D]            rows: b1_cat, gamma_cat, beta_cat
    w2_ref,           # [2D, OP]           block-structured fused second Linear
    b2_ref,           # [1, OP]            matching bias
    out_ref,          # [TB, OP]           packed: mu | logvar | probs | zeros
    *, hidden_dim: int, num_classes: int, out_pack: int,
    inv_temp: float, ln_eps: float,
):
    D, C = hidden_dim, num_classes

    x = x_ref[...]                                   # f32 throughout
    aux = aux_ref[...]
    b1 = aux[0:1, :]
    gamma = aux[1:2, :]
    beta = aux[2:3, :]

    # Fused first Linear for both heads (one MXU pass, f32 accumulate) + ReLU.
    h = jnp.dot(x, w1_ref[...], preferred_element_type=jnp.float32) + b1
    h = jnp.maximum(h, 0.0)                          # [TB, 2D]

    # Segmented LayerNorm over the fused hidden: lanes [0,D) = mean head,
    # lanes [D,2D) = logvar head.  No mid-tile lane slices / concats.
    col = lax.broadcasted_iota(jnp.int32, h.shape, 1)
    is_m = col < D
    mask_m = is_m.astype(jnp.float32)
    s_all = jnp.sum(h, axis=-1, keepdims=True)
    s_m = jnp.sum(h * mask_m, axis=-1, keepdims=True)
    mean = jnp.where(is_m, s_m, s_all - s_m) * jnp.float32(1.0 / D)
    c = h - mean
    c2 = c * c
    q_all = jnp.sum(c2, axis=-1, keepdims=True)
    q_m = jnp.sum(c2 * mask_m, axis=-1, keepdims=True)
    var = jnp.where(is_m, q_m, q_all - q_m) * jnp.float32(1.0 / D)
    hln = c * lax.rsqrt(var + ln_eps) * gamma + beta  # Dropout = identity (eval)

    # One block-structured matmul produces mu (cols 0:C), logvar (cols C:2C) and a
    # second copy of mu (cols 2C:3C) that the softmax is computed over in place.
    y = jnp.dot(hln, w2_ref[...], preferred_element_type=jnp.float32) + b2_ref[...]

    ocol = lax.broadcasted_iota(jnp.int32, y.shape, 1)
    pseg = jnp.logical_and(ocol >= 2 * C, ocol < 3 * C)
    z = y if inv_temp == 1.0 else y * jnp.float32(inv_temp)
    zm = jnp.where(pseg, z, -jnp.inf)                # -inf outside the probs segment
    zm = zm - jnp.max(zm, axis=-1, keepdims=True)
    e = jnp.exp(zm)                                  # exactly 0 outside the segment
    denom = jnp.sum(e, axis=-1, keepdims=True)
    probs = e * pl.reciprocal(denom, approx=False)

    # Single unmasked, lane-dense store of the whole packed row.
    out_ref[...] = jnp.where(pseg, probs, y)


def _pick_tb(B: int, D: int, out_pack: int, block_b: int) -> int:
    """Batch-tile size: big tiles for pipelining, >=2 grid steps for v7x megacore,
    explicit VMEM budget so the tile is portable to v7x's 64 MiB VMEM."""
    if B < 16:
        return B                                     # single full-dim block
    # Keep double-buffered input+output tiles under ~24 MiB (v7x-safe).
    vmem_budget = 24 << 20
    tb_vmem = vmem_budget // (2 * 4 * (D + out_pack))
    # Guarantee >= 2 grid steps so the parallel axis shards across v7x's two TCs.
    tb_half = _round_up((B + 1) // 2, 8)
    tb = min(block_b, tb_half, max(8, (tb_vmem // 8) * 8))
    return max(8, (tb // 8) * 8)


def emotion_uncertainty_head_v3(x, params, temperature: float = 1.0, block_b: int = 4096):
    """x: [B, D] float32. Returns (mu, logvar, probs), each [B, C] float32."""
    B, D = x.shape
    C = params["w2_mean"].shape[1]
    OP = _round_up(3 * C, 128)                       # packed-output lane width

    # ---- one-time parameter prep (would be precomputed/cached in real use) ----
    # Fused first Linear: [D, 2D] = [W1_mean | W1_logvar].
    w1 = jnp.concatenate([params["w1_mean"], params["w1_logvar"]], axis=1)
    # Stacked small params: rows = (b1_cat, gamma_cat, beta_cat), each [1, 2D].
    aux = jnp.concatenate(
        [
            jnp.concatenate([params["b1_mean"], params["b1_logvar"]], axis=1),
            jnp.concatenate([params["ln_g_mean"], params["ln_g_logvar"]], axis=1),
            jnp.concatenate([params["ln_b_mean"], params["ln_b_logvar"]], axis=1),
        ],
        axis=0,
    )
    # Block-structured fused second Linear (see kernel docstring for layout).
    w2cat = jnp.zeros((2 * D, OP), jnp.float32)
    w2cat = w2cat.at[:D, 0:C].set(params["w2_mean"])
    w2cat = w2cat.at[D:, C:2 * C].set(params["w2_logvar"])
    w2cat = w2cat.at[:D, 2 * C:3 * C].set(params["w2_mean"])    # copy for softmax
    b2cat = jnp.zeros((1, OP), jnp.float32)
    b2cat = b2cat.at[:, 0:C].set(params["b2_mean"])
    b2cat = b2cat.at[:, C:2 * C].set(params["b2_logvar"])
    b2cat = b2cat.at[:, 2 * C:3 * C].set(params["b2_mean"])

    # ---- batch tiling ----
    TB = _pick_tb(B, D, OP, block_b)
    nb = pl.cdiv(B, TB)

    def resident(shape):  # same block every grid step -> stays VMEM-resident
        return pl.BlockSpec(shape, lambda i: (0, 0))

    kernel = functools.partial(
        _emotion_head_kernel,
        hidden_dim=D, num_classes=C, out_pack=OP,
        inv_temp=1.0 / float(temperature), ln_eps=1e-5,
    )

    # Explicit VMEM budget (double-buffered in/out + resident weights), with headroom.
    vmem_bytes = 4 * (2 * TB * (D + OP) + 2 * (D * 2 * D + 3 * 2 * D + 2 * D * OP + OP))
    vmem_limit = int(min(100 << 20, max(32 << 20, 2 * vmem_bytes)))

    packed = pl.pallas_call(
        kernel,
        out_shape=jax.ShapeDtypeStruct((B, OP), jnp.float32),
        grid=(nb,),
        in_specs=[
            pl.BlockSpec((TB, D), lambda i: (i, 0)),
            resident((D, 2 * D)),
            resident((3, 2 * D)),
            resident((2 * D, OP)),
            resident((1, OP)),
        ],
        out_specs=pl.BlockSpec((TB, OP), lambda i: (i, 0)),
        compiler_params=pltpu.CompilerParams(
            dimension_semantics=("parallel",),
            vmem_limit_bytes=vmem_limit,
        ),
    )(x, w1, aux, w2cat, b2cat)

    mu = packed[:, 0:C]
    logvar = packed[:, C:2 * C]
    probs = packed[:, 2 * C:3 * C]
    return mu, logvar, probs


# ----------------------------- params / reference -----------------------------

def _xavier_uniform(key, fan_in, fan_out, dtype=jnp.float32):
    limit = (6.0 / (fan_in + fan_out)) ** 0.5
    return jax.random.uniform(key, (fan_in, fan_out), dtype, minval=-limit, maxval=limit)


def init_params(key, input_dim: int, num_classes: int):
    ks = jax.random.split(key, 4)
    # weights stored [in, out] so y = x @ W + b; biases/LN params as (1, D)/(1, C) rows
    return {
        "w1_mean": _xavier_uniform(ks[0], input_dim, input_dim),
        "b1_mean": jnp.zeros((1, input_dim), jnp.float32),
        "ln_g_mean": jnp.ones((1, input_dim), jnp.float32),
        "ln_b_mean": jnp.zeros((1, input_dim), jnp.float32),
        "w2_mean": _xavier_uniform(ks[1], input_dim, num_classes),
        "b2_mean": jnp.zeros((1, num_classes), jnp.float32),
        "w1_logvar": _xavier_uniform(ks[2], input_dim, input_dim),
        "b1_logvar": jnp.zeros((1, input_dim), jnp.float32),
        "ln_g_logvar": jnp.ones((1, input_dim), jnp.float32),
        "ln_b_logvar": jnp.zeros((1, input_dim), jnp.float32),
        "w2_logvar": _xavier_uniform(ks[3], input_dim, num_classes),
        "b2_logvar": jnp.zeros((1, num_classes), jnp.float32),
    }


def _reference(x, p, temperature):
    # Pure-JAX f32 reference matching the PyTorch module.
    def head(x, w1, b1, g, bt, w2, b2):
        h = jnp.maximum(x @ w1 + b1, 0.0)
        mean = jnp.mean(h, axis=-1, keepdims=True)
        var = jnp.mean((h - mean) ** 2, axis=-1, keepdims=True)
        h = (h - mean) / jnp.sqrt(var + 1e-5) * g + bt
        return h @ w2 + b2

    mu = head(x, p["w1_mean"], p["b1_mean"], p["ln_g_mean"], p["ln_b_mean"],
              p["w2_mean"], p["b2_mean"])
    logvar = head(x, p["w1_logvar"], p["b1_logvar"], p["ln_g_logvar"], p["ln_b_logvar"],
                  p["w2_logvar"], p["b2_logvar"])
    probs = jax.nn.softmax(mu / temperature, axis=-1)
    return mu, logvar, probs


if __name__ == "__main__":
    key = jax.random.PRNGKey(0)
    k_x, k_p = jax.random.split(key)

    D, C = 32, 8                 # input_dim, num_classes
    temperature = 1.0
    params = init_params(k_p, D, C)

    # B=8: single full-dim block.  B=100: two grid steps with a partial tail block.
    for B in (8, 100):
        x = jax.random.normal(jax.random.fold_in(k_x, B), (B, D), jnp.float32)

        mu, logvar, probs = emotion_uncertainty_head_v3(x, params, temperature)
        jax.block_until_ready((mu, logvar, probs))

        mu_r, lv_r, pr_r = _reference(x, params, temperature)
        assert mu.shape == (B, C) and logvar.shape == (B, C) and probs.shape == (B, C)
        assert jnp.allclose(mu, mu_r, atol=2e-2, rtol=2e-2), f"mu mismatch (B={B})"
        assert jnp.allclose(logvar, lv_r, atol=2e-2, rtol=2e-2), f"logvar mismatch (B={B})"
        assert jnp.allclose(probs, pr_r, atol=5e-3, rtol=5e-3), f"probs mismatch (B={B})"
        # Structural checks on the softmax output.
        assert jnp.allclose(jnp.sum(probs, axis=-1), 1.0, atol=1e-3), "probs rows must sum to 1"
        assert bool(jnp.all(probs >= 0.0)), "probs must be non-negative"

    print("KERNEL_OK")
</pallas_src>

<mosaic_0001>
module attributes {stable_mosaic.version = 11 : i64} {
  func.func @_emotion_head_kernel(%arg0: i32, %arg1: memref<8x32xf32, #tpu.memory_space<vmem>>, %arg2: memref<32x64xf32, #tpu.memory_space<vmem>>, %arg3: memref<3x64xf32, #tpu.memory_space<vmem>>, %arg4: memref<64x128xf32, #tpu.memory_space<vmem>>, %arg5: memref<1x128xf32, #tpu.memory_space<vmem>>, %arg6: memref<8x128xf32, #tpu.memory_space<vmem>>) attributes {dimension_semantics = [#tpu.dimension_semantics<parallel>], iteration_bounds = array<i64: 1>, scalar_prefetch = 0 : i64, scratch_operands = 0 : i64, tpu.core_type = #tpu.core_type<tc>, window_params = [{transform_indices = @transform_0, window_bounds = array<i64: 8, 32>}, {pipeline_mode = #tpu.pipeline_mode<synchronous>, transform_indices = @transform_1, window_bounds = array<i64: 32, 64>}, {pipeline_mode = #tpu.pipeline_mode<synchronous>, transform_indices = @transform_2, window_bounds = array<i64: 3, 64>}, {pipeline_mode = #tpu.pipeline_mode<synchronous>, transform_indices = @transform_3, window_bounds = array<i64: 64, 128>}, {pipeline_mode = #tpu.pipeline_mode<synchronous>, transform_indices = @transform_4, window_bounds = array<i64: 1, 128>}, {transform_indices = @transform_5, window_bounds = array<i64: 8, 128>}]} {
    %c0 = arith.constant 0 : index
    %c0_0 = arith.constant 0 : index
    %0 = vector.load %arg1[%c0, %c0_0] : memref<8x32xf32, #tpu.memory_space<vmem>>, vector<8x32xf32>
    %c0_1 = arith.constant 0 : index
    %c0_2 = arith.constant 0 : index
    %1 = vector.load %arg3[%c0_1, %c0_2] : memref<3x64xf32, #tpu.memory_space<vmem>>, vector<3x64xf32>
    %2 = vector.extract_strided_slice %1 {offsets = [0, 0], sizes = [1, 64], strides = [1, 1]} : vector<3x64xf32> to vector<1x64xf32>
    %3 = vector.extract_strided_slice %1 {offsets = [1, 0], sizes = [1, 64], strides = [1, 1]} : vector<3x64xf32> to vector<1x64xf32>
    %4 = vector.extract_strided_slice %1 {offsets = [2, 0], sizes = [1, 64], strides = [1, 1]} : vector<3x64xf32> to vector<1x64xf32>
    %c0_3 = arith.constant 0 : index
    %c0_4 = arith.constant 0 : index
    %5 = vector.load %arg2[%c0_3, %c0_4] : memref<32x64xf32, #tpu.memory_space<vmem>>, vector<32x64xf32>
    %cst = arith.constant dense<0.000000e+00> : vector<8x64xf32>
    %6 = tpu.matmul %0, %5, %cst {dimension_numbers = #tpu.dot_dimension_numbers<[1], [0], [0], [1], [0, 0, 1, 1], [], []>} : vector<8x32xf32>, vector<32x64xf32>, vector<8x64xf32> -> vector<8x64xf32>
    %7 = vector.broadcast %2 : vector<1x64xf32> to vector<8x64xf32>
    %8 = arith.addf %6, %7 : vector<8x64xf32>
    %cst_5 = arith.constant 0.000000e+00 : f32
    %9 = vector.broadcast %cst_5 : f32 to vector<8x64xf32>
    %10 = arith.maximumf %8, %9 : vector<8x64xf32>
    %11 = tpu.iota {dimensions = array<i32: 1>} : vector<8x64xi32>
    %c32_i32 = arith.constant 32 : i32
    %12 = vector.broadcast %c32_i32 : i32 to vector<8x64xi32>
    %13 = arith.cmpi slt, %11, %12 : vector<8x64xi32>
    %14 = arith.extui %13 : vector<8x64xi1> to vector<8x64xi32>
    %15 = arith.sitofp %14 : vector<8x64xi32> to vector<8x64xf32>
    %cst_6 = arith.constant dense<0.000000e+00> : vector<8xf32>
    %16 = vector.multi_reduction <add>, %10, %cst_6 [1] : vector<8x64xf32> to vector<8xf32>
    %17 = vector.shape_cast %16 : vector<8xf32> to vector<8x1xf32>
    %18 = arith.mulf %10, %15 : vector<8x64xf32>
    %cst_7 = arith.constant dense<0.000000e+00> : vector<8xf32>
    %19 = vector.multi_reduction <add>, %18, %cst_7 [1] : vector<8x64xf32> to vector<8xf32>
    %20 = vector.shape_cast %19 : vector<8xf32> to vector<8x1xf32>
    %21 = arith.subf %17, %20 : vector<8x1xf32>
    %22 = vector.shape_cast %20 : vector<8x1xf32> to vector<8x1xf32>
    %23 = vector.broadcast %22 : vector<8x1xf32> to vector<8x64xf32>
    %24 = vector.shape_cast %21 : vector<8x1xf32> to vector<8x1xf32>
    %25 = vector.broadcast %24 : vector<8x1xf32> to vector<8x64xf32>
    %26 = arith.select %13, %23, %25 : vector<8x64xi1>, vector<8x64xf32>
    %cst_8 = arith.constant 3.125000e-02 : f32
    %27 = vector.broadcast %cst_8 : f32 to vector<8x64xf32>
    %28 = arith.mulf %26, %27 : vector<8x64xf32>
    %29 = arith.subf %10, %28 : vector<8x64xf32>
    %30 = arith.mulf %29, %29 : vector<8x64xf32>
    %cst_9 = arith.constant dense<0.000000e+00> : vector<8xf32>
    %31 = vector.multi_reduction <add>, %30, %cst_9 [1] : vector<8x64xf32> to vector<8xf32>
    %32 = vector.shape_cast %31 : vector<8xf32> to vector<8x1xf32>
    %33 = arith.mulf %30, %15 : vector<8x64xf32>
    %cst_10 = arith.constant dense<0.000000e+00> : vector<8xf32>
    %34 = vector.multi_reduction <add>, %33, %cst_10 [1] : vector<8x64xf32> to vector<8xf32>
    %35 = vector.shape_cast %34 : vector<8xf32> to vector<8x1xf32>
    %36 = arith.subf %32, %35 : vector<8x1xf32>
    %37 = vector.shape_cast %35 : vector<8x1xf32> to vector<8x1xf32>
    %38 = vector.broadcast %37 : vector<8x1xf32> to vector<8x64xf32>
    %39 = vector.shape_cast %36 : vector<8x1xf32> to vector<8x1xf32>
    %40 = vector.broadcast %39 : vector<8x1xf32> to vector<8x64xf32>
    %41 = arith.select %13, %38, %40 : vector<8x64xi1>, vector<8x64xf32>
    %cst_11 = arith.constant 3.125000e-02 : f32
    %42 = vector.broadcast %cst_11 : f32 to vector<8x64xf32>
    %43 = arith.mulf %41, %42 : vector<8x64xf32>
    %cst_12 = arith.constant 9.99999974E-6 : f32
    %44 = vector.broadcast %cst_12 : f32 to vector<8x64xf32>
    %45 = arith.addf %43, %44 : vector<8x64xf32>
    %46 = math.rsqrt %45 : vector<8x64xf32>
    %47 = arith.mulf %29, %46 : vector<8x64xf32>
    %48 = vector.broadcast %3 : vector<1x64xf32> to vector<8x64xf32>
    %49 = arith.mulf %47, %48 : vector<8x64xf32>
    %50 = vector.broadcast %4 : vector<1x64xf32> to vector<8x64xf32>
    %51 = arith.addf %49, %50 : vector<8x64xf32>
    %c0_13 = arith.constant 0 : index
    %c0_14 = arith.constant 0 : index
    %52 = vector.load %arg4[%c0_13, %c0_14] : memref<64x128xf32, #tpu.memory_space<vmem>>, vector<64x128xf32>
    %cst_15 = arith.constant dense<0.000000e+00> : vector<8x128xf32>
    %53 = tpu.matmul %51, %52, %cst_15 {dimension_numbers = #tpu.dot_dimension_numbers<[1], [0], [0], [1], [0, 0, 1, 1], [], []>} : vector<8x64xf32>, vector<64x128xf32>, vector<8x128xf32> -> vector<8x128xf32>
    %c0_16 = arith.constant 0 : index
    %c0_17 = arith.constant 0 : index
    %54 = vector.load %arg5[%c0_16, %c0_17] : memref<1x128xf32, #tpu.memory_space<vmem>>, vector<1x128xf32>
    %55 = vector.broadcast %54 : vector<1x128xf32> to vector<8x128xf32>
    %56 = arith.addf %53, %55 : vector<8x128xf32>
    %57 = tpu.iota {dimensions = array<i32: 1>} : vector<8x128xi32>
    %c16_i32 = arith.constant 16 : i32
    %58 = vector.broadcast %c16_i32 : i32 to vector<8x128xi32>
    %59 = arith.cmpi sge, %57, %58 : vector<8x128xi32>
    %c24_i32 = arith.constant 24 : i32
    %60 = vector.broadcast %c24_i32 : i32 to vector<8x128xi32>
    %61 = arith.cmpi slt, %57, %60 : vector<8x128xi32>
    %62 = arith.andi %59, %61 : vector<8x128xi1>
    %cst_18 = arith.constant 0xFF800000 : f32
    %63 = vector.broadcast %cst_18 : f32 to vector<8x128xf32>
    %64 = arith.select %62, %56, %63 : vector<8x128xi1>, vector<8x128xf32>
    %cst_19 = arith.constant dense<0xFF800000> : vector<8xf32>
    %65 = vector.multi_reduction <maximumf>, %64, %cst_19 [1] : vector<8x128xf32> to vector<8xf32>
    %66 = vector.shape_cast %65 : vector<8xf32> to vector<8x1xf32>
    %67 = vector.broadcast %66 : vector<8x1xf32> to vector<8x128xf32>
    %68 = arith.subf %64, %67 : vector<8x128xf32>
    %69 = math.exp %68 : vector<8x128xf32>
    %cst_20 = arith.constant dense<0.000000e+00> : vector<8xf32>
    %70 = vector.multi_reduction <add>, %69, %cst_20 [1] : vector<8x128xf32> to vector<8xf32>
    %71 = vector.shape_cast %70 : vector<8xf32> to vector<8x1xf32>
    %72 = tpu.reciprocal %71 : vector<8x1xf32> -> vector<8x1xf32>
    %73 = vector.broadcast %72 : vector<8x1xf32> to vector<8x128xf32>
    %74 = arith.mulf %69, %73 : vector<8x128xf32>
    %75 = arith.select %62, %74, %56 : vector<8x128xi1>, vector<8x128xf32>
    %c0_21 = arith.constant 0 : index
    %c0_22 = arith.constant 0 : index
    %76 = vector.load %arg6[%c0_21, %c0_22] : memref<8x128xf32, #tpu.memory_space<vmem>>, vector<8x128xf32>
    tpu.vector_store %arg6[%c0_21, %c0_22], %75 {strides = array<i32>} : memref<8x128xf32, #tpu.memory_space<vmem>>, vector<8x128xf32>,
    return
  }
  func.func @transform_0(%arg0: i32) -> (i32, i32) {
    %c0_i32 = arith.constant 0 : i32
    %c0_i32_0 = arith.constant 0 : i32
    return %arg0, %c0_i32 : i32, i32
  }
  func.func @transform_1(%arg0: i32) -> (i32, i32) {
    %c0_i32 = arith.constant 0 : i32
    %c0_i32_0 = arith.constant 0 : i32
    %c0_i32_1 = arith.constant 0 : i32
    return %c0_i32, %c0_i32_0 : i32, i32
  }
  func.func @transform_2(%arg0: i32) -> (i32, i32) {
    %c0_i32 = arith.constant 0 : i32
    %c0_i32_0 = arith.constant 0 : i32
    %c0_i32_1 = arith.constant 0 : i32
    return %c0_i32, %c0_i32_0 : i32, i32
  }
  func.func @transform_3(%arg0: i32) -> (i32, i32) {
    %c0_i32 = arith.constant 0 : i32
    %c0_i32_0 = arith.constant 0 : i32
    %c0_i32_1 = arith.constant 0 : i32
    return %c0_i32, %c0_i32_0 : i32, i32
  }
  func.func @transform_4(%arg0: i32) -> (i32, i32) {
    %c0_i32 = arith.constant 0 : i32
    %c0_i32_0 = arith.constant 0 : i32
    %c0_i32_1 = arith.constant 0 : i32
    return %c0_i32, %c0_i32_0 : i32, i32
  }
  func.func @transform_5(%arg0: i32) -> (i32, i32) {
    %c0_i32 = arith.constant 0 : i32
    %c0_i32_0 = arith.constant 0 : i32
    return %arg0, %c0_i32 : i32, i32
  }
}

</mosaic_0001>

<llo_original>
// kernel: tpu_custom_call.1
$region0: #{tpu_custom_call.1}
  #allocation0 [shape = 'u32[]', space=smem, size = 0x4, offset = 0x4, fixed_abs, tag = 'smem constant byte address 0x4 - core index']
  #allocation1 [shape = 'u32[144,128]{1,0:T(1,128)}', space=vmem, size = 0x12000, scoped, tag = 'internal scratch']
  %s0 = inlined_call_operand.hbm [shape: f32[8,32], index: 0, kind: input, shape index: {}]
  %s1 = inlined_call_operand.hbm [shape: f32[32,64], index: 1, kind: input, shape index: {}]
  %s2 = inlined_call_operand.vmem [shape: f32[3,64], index: 2, kind: input, shape index: {}]
  %s3 = inlined_call_operand.hbm [shape: f32[64,128], index: 3, kind: input, shape index: {}]
  %s4 = inlined_call_operand.vmem [shape: f32[1,128], index: 4, kind: input, shape index: {}]
  %s5 = inlined_call_operand.hbm [shape: f32[8,128], index: 5, kind: output, shape index: {}]
  %s6 = sld [smem:[#allocation0]]
  $region42: #{tpu_custom_call.1} parent=0
    _
  %s8 = ssub.s32 1, %s6
  %s9 = scalar_select 0, %s8, %s6
  $region1: #{tpu_custom_call.1} parent=0
    #allocation2 [shape = 'u8[4096]{0}', space=vmem, size = 0x1000, scoped, tag = 'input window, operand 0, single buffered']
    #allocation3 [shape = 's32[1]{0}', space=sflag, size = 0x4, scoped, tag = 'scoped memory for tpu_custom_call.1']
    #allocation4 [shape = 's32[1]{0}', space=sflag, size = 0x4, scoped, tag = 'scoped memory for tpu_custom_call.1']
    #allocation5 [shape = 'u8[16384]{0}', space=vmem, size = 0x4000, scoped, tag = 'input window, operand 1, single buffered']
    #allocation6 [shape = 's32[1]{0}', space=sflag, size = 0x4, scoped, tag = 'scoped memory for tpu_custom_call.1']
    #allocation7 [shape = 'u8[32768]{0}', space=vmem, size = 0x8000, scoped, tag = 'input window, operand 3, single buffered']
    #allocation8 [shape = 'u8[4096]{0}', space=vmem, size = 0x1000, scoped, tag = 'output window, operand 0, single buffered']
    %10 = vsyncpa [#allocation3], 0
    %11 = vsyncpa [#allocation6], 0
    %12 = vsyncpa [#allocation4], 0
    // Predicated region
    $region2: #{tpu_custom_call.1} parent=1 // pred_check
      _
    $region3: #{tpu_custom_call.1} parent=1 // pred_check_branch
      %14 = sbr.rel (0) target = $region5
    $region4: #{tpu_custom_call.1} parent=1 // pred_region
      %s16 = ssub.s32 128, 128
      %17 = vsyncadd [#allocation3], %s16
      %s19 = sshll.u32 [#allocation2], 4
      %s20 = int_to_ptr.vmem [resolvable:$true] %s19
      %22 = dma.hbm_to_vmem [thread:$0]  %s0, 128, %s20, [#allocation3]
    $region5: #{tpu_custom_call.1} parent=1 // pred_fallthru
      _
    // Predicated region
    $region6: #{tpu_custom_call.1} parent=1 // pred_check
      _
    $region7: #{tpu_custom_call.1} parent=1 // pred_check_branch
      %24 = sbr.rel (0) target = $region9
    $region8: #{tpu_custom_call.1} parent=1 // pred_region
      %s26 = ssub.s32 512, 512
      %27 = vsyncadd [#allocation6], %s26
      %s28 = sshll.u32 [#allocation5], 4
      %s29 = int_to_ptr.vmem [resolvable:$true] %s28
      %34 = dma.hbm_to_vmem [thread:$0]  %s1, 512, %s29, [#allocation6], 128, 128, 8
    $region9: #{tpu_custom_call.1} parent=1 // pred_fallthru
      _
    // Predicated region
    $region10: #{tpu_custom_call.1} parent=1 // pred_check
      _
    $region11: #{tpu_custom_call.1} parent=1 // pred_check_branch
      %36 = sbr.rel (0) target = $region13
    $region12: #{tpu_custom_call.1} parent=1 // pred_region
      _
    $region13: #{tpu_custom_call.1} parent=1 // pred_fallthru
      _
    // Predicated region
    $region14: #{tpu_custom_call.1} parent=1 // pred_check
      _
    $region15: #{tpu_custom_call.1} parent=1 // pred_check_branch
      %38 = sbr.rel (0) target = $region17
    $region16: #{tpu_custom_call.1} parent=1 // pred_region
      %s40 = ssub.s32 1024, 1024
      %41 = vsyncadd [#allocation6], %s40
      %s42 = sshll.u32 [#allocation7], 4
      %s43 = int_to_ptr.vmem [resolvable:$true] %s42
      %48 = dma.hbm_to_vmem [thread:$0]  %s3, 1024, %s43, [#allocation6], 128, 128, 8
    $region17: #{tpu_custom_call.1} parent=1 // pred_fallthru
      _
    // Predicated region
    $region18: #{tpu_custom_call.1} parent=1 // pred_check
      _
    $region19: #{tpu_custom_call.1} parent=1 // pred_check_branch
      %50 = sbr.rel (0) target = $region21
    $region20: #{tpu_custom_call.1} parent=1 // pred_region
      _
    $region21: #{tpu_custom_call.1} parent=1 // pred_fallthru
      _
    // Predicated region
    $region22: #{tpu_custom_call.1} parent=1 // pred_check
      _
    $region23: #{tpu_custom_call.1} parent=1 // pred_check_branch
      %52 = sbr.rel (0) target = $region25
    $region24: #{tpu_custom_call.1} parent=1 // pred_region
      %53 = dma.done [#allocation3], 128
    $region25: #{tpu_custom_call.1} parent=1 // pred_fallthru
      _
    // Predicated region
    $region26: #{tpu_custom_call.1} parent=1 // pred_check
      _
    $region27: #{tpu_custom_call.1} parent=1 // pred_check_branch
      %55 = sbr.rel (0) target = $region29
    $region28: #{tpu_custom_call.1} parent=1 // pred_region
      %56 = dma.done [#allocation6], 512
    $region29: #{tpu_custom_call.1} parent=1 // pred_fallthru
      _
    // Predicated region
    $region30: #{tpu_custom_call.1} parent=1 // pred_check
      _
    $region31: #{tpu_custom_call.1} parent=1 // pred_check_branch
      %58 = sbr.rel (0) target = $region33
    $region32: #{tpu_custom_call.1} parent=1 // pred_region
      %59 = dma.done [#allocation6], 1024
    $region33: #{tpu_custom_call.1} parent=1 // pred_fallthru
      _
    %v60 = vld [vmem:[#allocation2] sm:$0xff]
    %v61 = vld [vmem:[%s2] sm:$0x7]
    %v62 = vld [vmem:[#allocation5] sm:$0xff]
    %v63 = vld [vmem:[#allocation5 + $0x8] sm:$0xff]
    %v64 = vld [vmem:[#allocation5 + $0x10] sm:$0xff]
    %v65 = vld [vmem:[#allocation5 + $0x18] sm:$0xff]
    %v66 = vlaneseq
    %v67 = vshrl.u32 %v66, 7
    %v68 = vsub.s32 0, %v67
    %v69 = vrot.slane %v61, %v68
    %vm70 = vcmask 261120
    %v72 = vsel %vm70, %v60, 0
    %74 = vmatprep.subr.mxu0 0.0
    %75 = vmatpush1.msra.mxu0 %v62
    %76 = vmatprep.subr.mxu0 0.0
    %77 = vmatpush1.msra.mxu0 %v63
    %78 = vmatprep.subr.mxu0 0.0
    %79 = vmatpush1.msra.mxu0 %v64
    %80 = vmatprep.subr.mxu0 0.0
    %81 = vmatpush1.msra.mxu0 %v65
    %82 = vmatprep.subr.mxu0 0.0
    %83 = vmatpush1.msra.mxu0 0.0
    %84 = vmatprep.subr.mxu0 0.0
    %85 = vmatpush1.msra.mxu0 0.0
    %86 = vmatprep.subr.mxu0 0.0
    %87 = vmatpush1.msra.mxu0 0.0
    %88 = vmatprep.subr.mxu0 0.0
    %89 = vmatpush1.msra.mxu0 0.0
    %90 = vmatprep.subr.mxu0 0.0
    %91 = vmatpush1.msra.mxu0 0.0
    %92 = vmatprep.subr.mxu0 0.0
    %93 = vmatpush1.msra.mxu0 0.0
    %94 = vmatprep.subr.mxu0 0.0
    %95 = vmatpush1.msra.mxu0 0.0
    %96 = vmatprep.subr.mxu0 0.0
    %97 = vmatpush1.msra.mxu0 0.0
    %98 = vmatprep.subr.mxu0 0.0
    %99 = vmatpush1.msra.mxu0 0.0
    %100 = vmatprep.subr.mxu0 0.0
    %101 = vmatpush1.msra.mxu0 0.0
    %102 = vmatprep.subr.mxu0 0.0
    %103 = vmatpush1.msra.mxu0 0.0
    %104 = vmatprep.subr.mxu0 0.0
    %105 = vmatpush1.msra.mxu0 0.0
    %106 = vmatprep.subr.mxu0 0.0
    %107 = vmatpush1.msra.mxu0 0.0
    %108 = vmatprep.subr.mxu0 0.0
    %109 = vmatpush1.msra.mxu0 0.0
    %110 = vmatprep.subr.mxu0 0.0
    %111 = vmatpush1.msra.mxu0 0.0
    %112 = vmatprep.subr.mxu0 0.0
    %113 = vmatpush1.msra.mxu0 0.0
    %114 = vmatprep.subr.mxu0 0.0
    %115 = vmatpush1.msra.mxu0 0.0
    %116 = vmatprep.subr.mxu0 0.0
    %117 = vmatpush1.msra.mxu0 0.0
    %118 = vmatprep.subr.mxu0 0.0
    %119 = vmatpush1.msra.mxu0 0.0
    %120 = vmatprep.subr.mxu0 0.0
    %121 = vmatpush1.msra.mxu0 0.0
    %122 = vmatprep.subr.mxu0 0.0
    %123 = vmatpush1.msra.mxu0 0.0
    %124 = vmatprep.subr.mxu0 0.0
    %125 = vmatpush1.msra.mxu0 0.0
    %126 = vmatprep.subr.mxu0 0.0
    %127 = vmatpush1.msra.mxu0 0.0
    %128 = vmatprep.subr.mxu0 0.0
    %129 = vmatpush1.msra.mxu0 0.0
    %130 = vmatprep.subr.mxu0 0.0
    %131 = vmatpush1.msra.mxu0 0.0
    %132 = vmatprep.subr.mxu0 0.0
    %133 = vmatpush1.msra.mxu0 0.0
    %134 = vmatprep.subr.mxu0 0.0
    %135 = vmatpush1.msra.mxu0 0.0
    %136 = vmatprep.subr.mxu0 0.0
    %137 = vmatpush1.msra.mxu0 0.0
    %138 = vmatprep.mubr.f32.mxu0 0.0
    %139 = vmatmul.mubr.f32.gmra.mrb[0].mxu0 %v72
    %v140 = vpop.f32.mrb[0].mxu0
    %v141 = vadd.f32 %v69, %v140
    %v142 = vpop.f32.mrb[0].mxu0
    %143 = vdwg.mxu0
    %v144 = vmax.f32 %v141, 0.0
    %v145 = vlaneseq
    %v146 = vand.u32 %v145, 127
    %vm147 = vcmp.lt.s32.totalorder %v146, 32
    %v148 = vsel %vm147, 1, 0
    %v149 = vcvt.s32.f32 %v148
    %vm150 = vcmask 523264
    %v151 = vsel %vm150, %v144, 0.0
    %152 = vadd.xlane.f32.xlu0 %v151
    %v153 = vpop.xlane.xlu0 %152
    %v154 = vmul.f32 %v144, %v149
    %v155 = vsel %vm150, %v154, 0.0
    %156 = vadd.xlane.f32.xlu0 %v155
    %v157 = vpop.xlane.xlu0 %156
    %v158 = vsub.f32 %v153, %v157
    %v159 = vsel %vm147, %v157, %v158
    %v160 = vmul.f32 %v159, 0.03125
    %v161 = vsub.f32 %v144, %v160
    %v162 = vmul.f32 %v161, %v161
    %v163 = vsel %vm150, %v162, 0.0
    %164 = vadd.xlane.f32.xlu0 %v163
    %v165 = vpop.xlane.xlu0 %164
    %v166 = vmul.f32 %v162, %v149
    %v167 = vsel %vm150, %v166, 0.0
    %168 = vadd.xlane.f32.xlu0 %v167
    %v169 = vpop.xlane.xlu0 %168
    %v170 = vsub.f32 %v165, %v169
    %v171 = vsel %vm147, %v169, %v170
    %v172 = vmul.f32 %v171, 0.03125
    %v173 = vadd.f32 %v172, 1e-05
    %v174 = vrsqrt.pop %v173
    %v175 = vmul.f32 %v161, %v174
    %v176 = vlaneseq
    %v177 = vshrl.u32 %v176, 7
    %v178 = vsub.s32 1, %v177
    %v179 = vrot.slane %v61, %v178
    %v180 = vmul.f32 %v175, %v179
    %v181 = vlaneseq
    %v182 = vshrl.u32 %v181, 7
    %v183 = vsub.s32 2, %v182
    %v184 = vrot.slane %v61, %v183
    %v185 = vadd.f32 %v180, %v184
    %v186 = vld [vmem:[#allocation7] sm:$0xff]
    %v187 = vld [vmem:[#allocation7 + $0x8] sm:$0xff]
    %v188 = vld [vmem:[#allocation7 + $0x10] sm:$0xff]
    %v189 = vld [vmem:[#allocation7 + $0x18] sm:$0xff]
    %v190 = vld [vmem:[#allocation7 + $0x20] sm:$0xff]
    %v191 = vld [vmem:[#allocation7 + $0x28] sm:$0xff]
    %v192 = vld [vmem:[#allocation7 + $0x30] sm:$0xff]
    %v193 = vld [vmem:[#allocation7 + $0x38] sm:$0xff]
    %v194 = vld [vmem:[%s4] sm:$0x1]
    %v196 = vlaneseq
    %v197 = vshrl.u32 %v196, 7
    %v198 = vsub.s32 0, %v197
    %v199 = vrot.slane %v194, %v198
    %v202 = vsel %vm150, %v185, 0
    %204 = vmatprep.subr.mxu0 0.0
    %205 = vmatpush1.msra.mxu0 %v186
    %206 = vmatprep.subr.mxu0 0.0
    %207 = vmatpush1.msra.mxu0 %v187
    %208 = vmatprep.subr.mxu0 0.0
    %209 = vmatpush1.msra.mxu0 %v188
    %210 = vmatprep.subr.mxu0 0.0
    %211 = vmatpush1.msra.mxu0 %v189
    %212 = vmatprep.subr.mxu0 0.0
    %213 = vmatpush1.msra.mxu0 %v190
    %214 = vmatprep.subr.mxu0 0.0
    %215 = vmatpush1.msra.mxu0 %v191
    %216 = vmatprep.subr.mxu0 0.0
    %217 = vmatpush1.msra.mxu0 %v192
    %218 = vmatprep.subr.mxu0 0.0
    %219 = vmatpush1.msra.mxu0 %v193
    %220 = vmatprep.subr.mxu0 0.0
    %221 = vmatpush1.msra.mxu0 0.0
    %222 = vmatprep.subr.mxu0 0.0
    %223 = vmatpush1.msra.mxu0 0.0
    %224 = vmatprep.subr.mxu0 0.0
    %225 = vmatpush1.msra.mxu0 0.0
    %226 = vmatprep.subr.mxu0 0.0
    %227 = vmatpush1.msra.mxu0 0.0
    %228 = vmatprep.subr.mxu0 0.0
    %229 = vmatpush1.msra.mxu0 0.0
    %230 = vmatprep.subr.mxu0 0.0
    %231 = vmatpush1.msra.mxu0 0.0
    %232 = vmatprep.subr.mxu0 0.0
    %233 = vmatpush1.msra.mxu0 0.0
    %234 = vmatprep.subr.mxu0 0.0
    %235 = vmatpush1.msra.mxu0 0.0
    %236 = vmatprep.subr.mxu0 0.0
    %237 = vmatpush1.msra.mxu0 0.0
    %238 = vmatprep.subr.mxu0 0.0
    %239 = vmatpush1.msra.mxu0 0.0
    %240 = vmatprep.subr.mxu0 0.0
    %241 = vmatpush1.msra.mxu0 0.0
    %242 = vmatprep.subr.mxu0 0.0
    %243 = vmatpush1.msra.mxu0 0.0
    %244 = vmatprep.subr.mxu0 0.0
    %245 = vmatpush1.msra.mxu0 0.0
    %246 = vmatprep.subr.mxu0 0.0
    %247 = vmatpush1.msra.mxu0 0.0
    %248 = vmatprep.subr.mxu0 0.0
    %249 = vmatpush1.msra.mxu0 0.0
    %250 = vmatprep.subr.mxu0 0.0
    %251 = vmatpush1.msra.mxu0 0.0
    %252 = vmatprep.subr.mxu0 0.0
    %253 = vmatpush1.msra.mxu0 0.0
    %254 = vmatprep.subr.mxu0 0.0
    %255 = vmatpush1.msra.mxu0 0.0
    %256 = vmatprep.subr.mxu0 0.0
    %257 = vmatpush1.msra.mxu0 0.0
    %258 = vmatprep.subr.mxu0 0.0
    %259 = vmatpush1.msra.mxu0 0.0
    %260 = vmatprep.subr.mxu0 0.0
    %261 = vmatpush1.msra.mxu0 0.0
    %262 = vmatprep.subr.mxu0 0.0
    %263 = vmatpush1.msra.mxu0 0.0
    %264 = vmatprep.subr.mxu0 0.0
    %265 = vmatpush1.msra.mxu0 0.0
    %266 = vmatprep.subr.mxu0 0.0
    %267 = vmatpush1.msra.mxu0 0.0
    %268 = vmatprep.mubr.f32.mxu0 0.0
    %269 = vmatmul.mubr.f32.gmra.mrb[0].mxu0 %v202
    %v270 = vpop.f32.mrb[0].mxu0
    %v271 = vadd.f32 %v199, %v270
    %v272 = vpop.f32.mrb[0].mxu0
    %273 = vdwg.mxu0
    %vm274 = vcmp.ge.s32.totalorder %v146, 16
    %vm275 = vcmp.lt.s32.totalorder %v146, 24
    %vm276 = vmand %vm274, %vm275
    %v277 = vsel %vm276, %v271, -inf
    %278 = vmax.xlane.f32.xlu0 %v277
    %v279 = vpop.xlane.xlu0 %278
    %v280 = vsub.f32 %v277, %v279
    %v281 = vmul.f32 %v280, 1.442695
    %v282 = vpow.pop %v281
    %283 = vadd.xlane.f32.xlu0 %v282
    %v284 = vpop.xlane.xlu0 %283
    %v285 = vrcp.pop %v284
    %v286 = vmul.f32 %v282, %v285
    %v287 = vsel %vm276, %v286, %v271
    %288 = vst [vmem:[#allocation8] sm:$0xff] %v287
    // Predicated region
    $region34: #{tpu_custom_call.1} parent=1 // pred_check
      _
    $region35: #{tpu_custom_call.1} parent=1 // pred_check_branch
      %290 = sbr.rel (0) target = $region37
    $region36: #{tpu_custom_call.1} parent=1 // pred_region
      %s292 = ssub.s32 128, 128
      %293 = vsyncadd [#allocation4], %s292
      %s295 = sshll.u32 [#allocation8], 4
      %s296 = int_to_ptr.vmem [resolvable:$true] %s295
      %298 = dma.vmem_to_hbm [thread:$0]  %s296, 128, %s5, [#allocation4]
    $region37: #{tpu_custom_call.1} parent=1 // pred_fallthru
      _
    // Predicated region
    $region38: #{tpu_custom_call.1} parent=1 // pred_check
      _
    $region39: #{tpu_custom_call.1} parent=1 // pred_check_branch
      %300 = sbr.rel (0) target = $region41
    $region40: #{tpu_custom_call.1} parent=1 // pred_region
      %301 = dma.done [#allocation4], 128
    $region41: #{tpu_custom_call.1} parent=1 // pred_fallthru
      _
    %302 = vsyncpa [#allocation3], 1
    %303 = vsyncpa [#allocation6], 1
    %304 = vsyncpa [#allocation4], 1

</llo_original>
